<compile_context>
chip_gen: v7x
topology: tpu7x:2x2x1
jax: 0.10.0
libtpu: 0.0.40
codegen_flags: <defaults>
</compile_context>

<pallas_src>
import functools
from typing import NamedTuple

import jax
import jax.numpy as jnp
from jax.experimental import pallas as pl
from jax.experimental.pallas import tpu as pltpu


# ------------------------------------------------------------------ kernels --

def _ffn_kernel_streamed(x_ref, w1_ref, b1_ref, w2_ref, b2_ref, o_ref, acc_ref):
    """Grid (row tiles, d_ff chunks); accumulate partial fc2 outputs in f32."""
    k = pl.program_id(1)

    @pl.when(k == 0)
    def _init():
        acc_ref[...] = jnp.zeros_like(acc_ref)

    h = jnp.dot(x_ref[...], w1_ref[...], preferred_element_type=jnp.float32)
    h = jnp.maximum(h + b1_ref[...], 0.0)                 # bias + ReLU (this chunk)
    acc_ref[...] += jnp.dot(h.astype(w2_ref.dtype), w2_ref[...],
                            preferred_element_type=jnp.float32)

    @pl.when(k == pl.num_programs(1) - 1)
    def _finalize():
        o_ref[...] = (acc_ref[...] + b2_ref[...]).astype(o_ref.dtype)


def _ffn_kernel_resident(x_ref, w1_ref, b1_ref, w2_ref, b2_ref, o_ref):
    """Grid (row tiles,); both weight matrices are fully VMEM-resident."""
    h = jnp.dot(x_ref[...], w1_ref[...], preferred_element_type=jnp.float32)
    h = jnp.maximum(h + b1_ref[...], 0.0)
    y = jnp.dot(h.astype(w2_ref.dtype), w2_ref[...],
                preferred_element_type=jnp.float32)
    o_ref[...] = (y + b2_ref[...]).astype(o_ref.dtype)


# ------------------------------------------------------------------ helpers --

def _round_up(x, m):
    return ((x + m - 1) // m) * m


def _pad_dim(d):
    """Lane-dense padding: multiples of 128; 256 for large unaligned dims
    (v6e/v7x MXUs are 256x256)."""
    if d % 128 == 0:
        return d
    if d < 256:
        return _round_up(d, 128)
    return _round_up(d, 256)


def _pad2d(a, rows, cols):
    r, c = a.shape
    if r == rows and c == cols:
        return a                        # skip the pad copy entirely
    return jnp.pad(a, ((0, rows - r), (0, cols - c)))


@functools.lru_cache(maxsize=None)
def _vmem_budget_bytes():
    """Per-TensorCore VMEM budget with headroom for Mosaic internal scratch."""
    cap = 64 << 20                      # conservative fallback (v7x-sized)
    try:
        cap = int(pltpu.get_tpu_info().vmem_capacity_bytes)
    except Exception:
        pass
    # v5e/v6e (128 MiB) -> ~110 MiB usable; v7x (64 MiB) -> ~56 MiB usable.
    return max(min(cap - (8 << 20), 110 << 20), 24 << 20)


def _probe_kernel(x_ref, o_ref):
    o_ref[...] = x_ref[...] + 1.0


@functools.lru_cache(maxsize=None)
def _single_buffer_supported():
    """Probe whether pipeline_mode=pl.Buffered(1) is available, so constant-
    index weights/biases don't waste a second VMEM buffer."""
    try:
        fn = pl.pallas_call(
            _probe_kernel,
            out_shape=jax.ShapeDtypeStruct((8, 128), jnp.float32),
            grid=(2,),
            in_specs=[pl.BlockSpec((8, 128), lambda i: (0, 0),
                                   pipeline_mode=pl.Buffered(1))],
            out_specs=pl.BlockSpec((8, 128), lambda i: (0, 0)),
        )
        jax.block_until_ready(fn(jnp.zeros((8, 128), jnp.float32)))
        return True
    except Exception:
        return False


def _const_spec(block_shape, index_map, single_buf):
    """BlockSpec for a block whose index never changes across the grid."""
    if single_buf:
        return pl.BlockSpec(block_shape, index_map, pipeline_mode=pl.Buffered(1))
    return pl.BlockSpec(block_shape, index_map)


# --------------------------------------------------------- VMEM cost models --

def _resident_vmem(tm, dmp, dfp, itemsize, w_itemsize, wbuf):
    return (2 * tm * dmp * itemsize              # x tile (double-buffered)
            + 2 * tm * dmp * itemsize            # out tile (double-buffered)
            + wbuf * dmp * dfp * w_itemsize      # w1 resident
            + wbuf * dfp * dmp * w_itemsize      # w2 resident
            + wbuf * 8 * (dfp + dmp) * w_itemsize  # biases (sublane padded)
            + tm * dfp * 4                       # h   (f32 intermediate)
            + tm * dmp * 4)                      # fc2 (f32 intermediate)


def _stream_vmem(tm, tf, dmp, itemsize, w_itemsize, wbuf_b2):
    return (2 * tm * dmp * itemsize              # x tile (double-buffered)
            + 2 * tm * dmp * itemsize            # out tile (double-buffered)
            + 2 * dmp * tf * w_itemsize          # w1 chunk stream
            + 2 * tf * dmp * w_itemsize          # w2 chunk stream
            + 2 * 8 * tf * w_itemsize            # b1 chunk stream
            + wbuf_b2 * 8 * dmp * w_itemsize     # b2 (constant index)
            + tm * dmp * 4                       # f32 accumulator scratch
            + tm * tf * 4                        # h (f32 intermediate)
            + tm * dmp * 4)                      # per-step f32 partial product


# ------------------------------------------------------------------ planner --

class _Plan(NamedTuple):
    resident: bool
    tm: int
    tf: int
    d_model_p: int
    d_ff_p: int
    grid_m: int
    grid_k: int
    m_p: int
    vmem_limit: int
    single_buf: bool


_MARGIN = 2 << 20   # headroom inside the budget for Mosaic bookkeeping


def _plan_ffn(M, d_model, d_ff, x_dtype, w_dtype, tm, tf):
    itemsize = jnp.dtype(x_dtype).itemsize
    w_itemsize = jnp.dtype(w_dtype).itemsize
    sublane = {4: 8, 2: 16, 1: 32}.get(itemsize, 8)
    d_model_p = _pad_dim(d_model)
    budget = _vmem_budget_bytes()
    single_buf = _single_buffer_supported()
    wbuf = 1 if single_buf else 2

    # Row-tile candidates, largest first.  Big tiles amortise the weight stream;
    # for large M keep >=2 row tiles so both v7x TensorCores get work on the
    # "parallel" row axis (harmless extra grid step on 1-TC chips).
    m_r = _round_up(max(M, 1), sublane)
    row_cap = m_r if m_r < 1024 else _round_up(pl.cdiv(m_r, 2), sublane)
    if tm is not None:
        tm_cands = [_round_up(max(sublane, min(tm, m_r)), sublane)]
    else:
        base = (1024, 768, 512, 384, 256, 128, 64, 32)
        tm_cands = sorted({c for c in base if c <= row_cap} | {row_cap},
                          reverse=True)

    def finish(resident, tm_e, tf_e, d_ff_p, grid_k, est):
        grid_m = pl.cdiv(M, tm_e)
        vmem_limit = int(min(budget, max(32 << 20, est + (4 << 20))))
        return _Plan(resident, tm_e, tf_e, d_model_p, d_ff_p, grid_m, grid_k,
                     grid_m * tm_e, vmem_limit, single_buf)

    # Weights-resident fast path: both weight matrices live in VMEM and are
    # DMA'd exactly once (no per-row-tile re-streaming).
    if tf is None or tf >= d_ff:
        d_ff_res = _pad_dim(d_ff)
        for cand in tm_cands:
            est = _resident_vmem(cand, d_model_p, d_ff_res, itemsize,
                                 w_itemsize, wbuf)
            if est + _MARGIN <= budget and (tm is not None
                                            or cand >= min(256, m_r)):
                return finish(True, cand, d_ff_res, d_ff_res, 1, est)

    # Streamed path: tile d_ff along an inner reduction grid axis.
    d_ff_r = _round_up(d_ff, 128)
    if tf is not None:
        tf_cands = [min(_round_up(max(tf, 128), 128), d_ff_r)]
    else:
        tf_cands = [c for c in (1024, 512, 256, 128) if c <= d_ff_r] or [d_ff_r]

    pick = None
    for cm in tm_cands:                 # prefer large tm (weight-stream lever),
        for cf in tf_cands:             # then large tf (acc RMW / step overhead)
            if (_stream_vmem(cm, cf, d_model_p, itemsize, w_itemsize, wbuf)
                    + _MARGIN <= budget):
                pick = (cm, cf)
                break
        if pick is not None:
            break
    if pick is None:                    # nothing fits the estimate: smallest tiles
        pick = (tm_cands[-1], tf_cands[-1])

    tm_e, cf = pick
    grid_k = pl.cdiv(d_ff_r, cf)
    tf_e = _round_up(pl.cdiv(d_ff_r, grid_k), 128)   # balanced chunks, minimal pad
    est = _stream_vmem(tm_e, tf_e, d_model_p, itemsize, w_itemsize, wbuf)
    return finish(False, tm_e, tf_e, grid_k * tf_e, grid_k, est)


# ----------------------------------------------------------------- impl/api --

@functools.partial(jax.jit, static_argnames=("plan",))
def _ffn_impl(x, w1, b1, w2, b2, plan):
    batch, seq, d_model = x.shape
    d_ff = w1.shape[1]
    M = batch * seq
    p = plan
    itemsize = jnp.dtype(x.dtype).itemsize
    w_itemsize = jnp.dtype(w1.dtype).itemsize

    # Pads are skipped when dims are already aligned (typical transformer dims).
    x2d = _pad2d(x.reshape(M, d_model), p.m_p, p.d_model_p)
    w1p = _pad2d(w1, p.d_model_p, p.d_ff_p)
    b1p = _pad2d(b1.reshape(1, d_ff), 1, p.d_ff_p)
    w2p = _pad2d(w2, p.d_ff_p, p.d_model_p)
    b2p = _pad2d(b2.reshape(1, d_model), 1, p.d_model_p)

    weight_reads = 1 if p.resident else p.grid_m   # streamed weights re-read per row tile
    cost = pl.CostEstimate(
        flops=4 * p.m_p * p.d_model_p * p.d_ff_p,
        transcendentals=0,
        bytes_accessed=int(x2d.size * itemsize
                           + p.m_p * p.d_model_p * itemsize
                           + weight_reads * (w1p.size + w2p.size + b1p.size) * w_itemsize
                           + b2p.size * w_itemsize),
    )

    if p.resident:
        out2d = pl.pallas_call(
            _ffn_kernel_resident,
            out_shape=jax.ShapeDtypeStruct((p.m_p, p.d_model_p), x.dtype),
            grid_spec=pltpu.PrefetchScalarGridSpec(
                num_scalar_prefetch=0,
                grid=(p.grid_m,),
                in_specs=[
                    pl.BlockSpec((p.tm, p.d_model_p), lambda i: (i, 0)),
                    _const_spec((p.d_model_p, p.d_ff_p), lambda i: (0, 0), p.single_buf),
                    _const_spec((1, p.d_ff_p), lambda i: (0, 0), p.single_buf),
                    _const_spec((p.d_ff_p, p.d_model_p), lambda i: (0, 0), p.single_buf),
                    _const_spec((1, p.d_model_p), lambda i: (0, 0), p.single_buf),
                ],
                out_specs=pl.BlockSpec((p.tm, p.d_model_p), lambda i: (i, 0)),
            ),
            compiler_params=pltpu.CompilerParams(
                dimension_semantics=("parallel",),
                vmem_limit_bytes=p.vmem_limit),
            cost_estimate=cost,
        )(x2d, w1p, b1p, w2p, b2p)
    else:
        out2d = pl.pallas_call(
            _ffn_kernel_streamed,
            out_shape=jax.ShapeDtypeStruct((p.m_p, p.d_model_p), x.dtype),
            grid_spec=pltpu.PrefetchScalarGridSpec(
                num_scalar_prefetch=0,
                grid=(p.grid_m, p.grid_k),
                in_specs=[
                    pl.BlockSpec((p.tm, p.d_model_p), lambda i, k: (i, 0)),   # x rows
                    pl.BlockSpec((p.d_model_p, p.tf), lambda i, k: (0, k)),   # w1 chunk
                    pl.BlockSpec((1, p.tf), lambda i, k: (0, k)),             # b1 chunk
                    pl.BlockSpec((p.tf, p.d_model_p), lambda i, k: (k, 0)),   # w2 chunk
                    _const_spec((1, p.d_model_p), lambda i, k: (0, 0), p.single_buf),  # b2
                ],
                out_specs=pl.BlockSpec((p.tm, p.d_model_p), lambda i, k: (i, 0)),
                scratch_shapes=[pltpu.VMEM((p.tm, p.d_model_p), jnp.float32)],
            ),
            compiler_params=pltpu.CompilerParams(
                dimension_semantics=("parallel", "arbitrary"),
                vmem_limit_bytes=p.vmem_limit),
            cost_estimate=cost,
        )(x2d, w1p, b1p, w2p, b2p)

    if p.m_p != M or p.d_model_p != d_model:
        out2d = out2d[:M, :d_model]     # only sliced when padding actually happened
    return out2d.reshape(batch, seq, d_model)


def position_wise_feed_forward(x, w1, b1, w2, b2, *, tm=None, tf=None):
    """y = relu(x @ w1 + b1) @ w2 + b2 ; x: (batch, seq, d_model).

    Weights are stored transposed vs. torch nn.Linear: w1 (d_model, d_ff),
    w2 (d_ff, d_model).  tm / tf override the auto-chosen row / d_ff tiles.
    """
    batch, seq, d_model = x.shape
    d_ff = w1.shape[1]
    plan = _plan_ffn(batch * seq, d_model, d_ff, x.dtype, w1.dtype, tm, tf)
    return _ffn_impl(x, w1, b1, w2, b2, plan)


# -------------------------------------------------------------------- tests --

def _init_params(key, d_model, d_ff, dtype=jnp.float32):
    # Deterministic synthetic init (mirrors torch Linear's 1/sqrt(fan_in) bound).
    k1, k2, k3, k4 = jax.random.split(key, 4)
    bound1 = 1.0 / (d_model ** 0.5)
    bound2 = 1.0 / (d_ff ** 0.5)
    # Stored transposed relative to torch nn.Linear.weight.
    w1 = jax.random.uniform(k1, (d_model, d_ff), dtype, -bound1, bound1)
    b1 = jax.random.uniform(k2, (d_ff,), dtype, -bound1, bound1)
    w2 = jax.random.uniform(k3, (d_ff, d_model), dtype, -bound2, bound2)
    b2 = jax.random.uniform(k4, (d_model,), dtype, -bound2, bound2)
    return w1, b1, w2, b2


def _reference(x, w1, b1, w2, b2):
    xf = x.astype(jnp.float32)
    h = jnp.maximum(xf @ w1.astype(jnp.float32) + b1.astype(jnp.float32), 0.0)
    return h @ w2.astype(jnp.float32) + b2.astype(jnp.float32)


if __name__ == "__main__":
    key = jax.random.PRNGKey(0)

    # --- test 1: module demo shapes (f32) -> weights-resident path ------------
    batch, seq, d_model, d_ff = 2, 8, 32, 64
    kx, kp, key = jax.random.split(key, 3)
    x = jax.random.normal(kx, (batch, seq, d_model), jnp.float32)
    w1, b1, w2, b2 = _init_params(kp, d_model, d_ff)
    out = jax.block_until_ready(position_wise_feed_forward(x, w1, b1, w2, b2))
    ref = _reference(x, w1, b1, w2, b2)
    assert out.shape == (batch, seq, d_model)
    assert jnp.allclose(out, ref, atol=1e-4, rtol=1e-4), "f32 mismatch vs reference"

    # --- test 2: ragged rows + explicit small tiles -> streamed path (2x2 grid)
    batch, seq, d_model, d_ff = 3, 7, 32, 256
    kx, kp, key = jax.random.split(key, 3)
    x = jax.random.normal(kx, (batch, seq, d_model), jnp.float32)
    w1, b1, w2, b2 = _init_params(kp, d_model, d_ff)
    out = jax.block_until_ready(
        position_wise_feed_forward(x, w1, b1, w2, b2, tm=16, tf=128))
    ref = _reference(x, w1, b1, w2, b2)
    assert out.shape == (batch, seq, d_model)
    assert jnp.allclose(out, ref, atol=1e-4, rtol=1e-4), "streamed-path mismatch"

    # --- test 3: bf16 activations/weights (MXU-peak dtype), f32 accumulation --
    batch, seq, d_model, d_ff = 2, 8, 32, 64
    kx, kp, key = jax.random.split(key, 3)
    x = jax.random.normal(kx, (batch, seq, d_model), jnp.bfloat16)
    w1, b1, w2, b2 = _init_params(kp, d_model, d_ff, dtype=jnp.bfloat16)
    out = jax.block_until_ready(position_wise_feed_forward(x, w1, b1, w2, b2))
    ref = _reference(x, w1, b1, w2, b2)
    assert out.shape == (batch, seq, d_model)
    assert jnp.allclose(out.astype(jnp.float32), ref, atol=5e-2, rtol=5e-2), \
        "bf16 mismatch vs f32 reference"

    print("KERNEL_OK")
</pallas_src>

<mosaic_0001>
module attributes {stable_mosaic.version = 11 : i64} {
  func.func @_probe_kernel(%arg0: i32, %arg1: memref<8x128xf32, #tpu.memory_space<vmem>>, %arg2: memref<8x128xf32, #tpu.memory_space<vmem>>) attributes {dimension_semantics = [#tpu.dimension_semantics<arbitrary>], iteration_bounds = array<i64: 2>, scalar_prefetch = 0 : i64, scratch_operands = 0 : i64, tpu.core_type = #tpu.core_type<tc>, window_params = [{pipeline_mode = #tpu.pipeline_mode<synchronous>, transform_indices = @transform_0, window_bounds = array<i64: 8, 128>}, {pipeline_mode = #tpu.pipeline_mode<synchronous>, transform_indices = @transform_1, window_bounds = array<i64: 8, 128>}]} {
    %c0 = arith.constant 0 : index
    %c0_0 = arith.constant 0 : index
    %0 = vector.load %arg1[%c0, %c0_0] : memref<8x128xf32, #tpu.memory_space<vmem>>, vector<8x128xf32>
    %cst = arith.constant 1.000000e+00 : f32
    %1 = vector.broadcast %cst : f32 to vector<8x128xf32>
    %2 = arith.addf %0, %1 : vector<8x128xf32>
    %c0_1 = arith.constant 0 : index
    %c0_2 = arith.constant 0 : index
    %3 = vector.load %arg2[%c0_1, %c0_2] : memref<8x128xf32, #tpu.memory_space<vmem>>, vector<8x128xf32>
    tpu.vector_store %arg2[%c0_1, %c0_2], %2 {strides = array<i32>} : memref<8x128xf32, #tpu.memory_space<vmem>>, vector<8x128xf32>,
    return
  }
  func.func @transform_0(%arg0: i32) -> (i32, i32) {
    %c0_i32 = arith.constant 0 : i32
    %c0_i32_0 = arith.constant 0 : i32
    %c0_i32_1 = arith.constant 0 : i32
    return %c0_i32, %c0_i32_0 : i32, i32
  }
  func.func @transform_1(%arg0: i32) -> (i32, i32) {
    %c0_i32 = arith.constant 0 : i32
    %c0_i32_0 = arith.constant 0 : i32
    %c0_i32_1 = arith.constant 0 : i32
    return %c0_i32, %c0_i32_0 : i32, i32
  }
}

module attributes {stable_mosaic.version = 11 : i64} {
  func.func @_ffn_kernel_resident(%arg0: i32, %arg1: memref<16x128xf32, #tpu.memory_space<vmem>>, %arg2: memref<128x128xf32, #tpu.memory_space<vmem>>, %arg3: memref<1x128xf32, #tpu.memory_space<vmem>>, %arg4: memref<128x128xf32, #tpu.memory_space<vmem>>, %arg5: memref<1x128xf32, #tpu.memory_space<vmem>>, %arg6: memref<16x128xf32, #tpu.memory_space<vmem>>) attributes {dimension_semantics = [#tpu.dimension_semantics<parallel>], iteration_bounds = array<i64: 1>, scalar_prefetch = 0 : i64, scratch_operands = 0 : i64, tpu.core_type = #tpu.core_type<tc>, window_params = [{transform_indices = @transform_0, window_bounds = array<i64: 16, 128>}, {pipeline_mode = #tpu.pipeline_mode<synchronous>, transform_indices = @transform_1, window_bounds = array<i64: 128, 128>}, {pipeline_mode = #tpu.pipeline_mode<synchronous>, transform_indices = @transform_2, window_bounds = array<i64: 1, 128>}, {pipeline_mode = #tpu.pipeline_mode<synchronous>, transform_indices = @transform_3, window_bounds = array<i64: 128, 128>}, {pipeline_mode = #tpu.pipeline_mode<synchronous>, transform_indices = @transform_4, window_bounds = array<i64: 1, 128>}, {transform_indices = @transform_5, window_bounds = array<i64: 16, 128>}]} {
    %c0 = arith.constant 0 : index
    %c0_0 = arith.constant 0 : index
    %0 = vector.load %arg1[%c0, %c0_0] : memref<16x128xf32, #tpu.memory_space<vmem>>, vector<16x128xf32>
    %c0_1 = arith.constant 0 : index
    %c0_2 = arith.constant 0 : index
    %1 = vector.load %arg2[%c0_1, %c0_2] : memref<128x128xf32, #tpu.memory_space<vmem>>, vector<128x128xf32>
    %cst = arith.constant dense<0.000000e+00> : vector<16x128xf32>
    %2 = tpu.matmul %0, %1, %cst {dimension_numbers = #tpu.dot_dimension_numbers<[1], [0], [0], [1], [0, 0, 1, 1], [], []>} : vector<16x128xf32>, vector<128x128xf32>, vector<16x128xf32> -> vector<16x128xf32>
    %c0_3 = arith.constant 0 : index
    %c0_4 = arith.constant 0 : index
    %3 = vector.load %arg3[%c0_3, %c0_4] : memref<1x128xf32, #tpu.memory_space<vmem>>, vector<1x128xf32>
    %4 = vector.broadcast %3 : vector<1x128xf32> to vector<16x128xf32>
    %5 = arith.addf %2, %4 : vector<16x128xf32>
    %cst_5 = arith.constant 0.000000e+00 : f32
    %6 = vector.broadcast %cst_5 : f32 to vector<16x128xf32>
    %7 = arith.maximumf %5, %6 : vector<16x128xf32>
    %c0_6 = arith.constant 0 : index
    %c0_7 = arith.constant 0 : index
    %8 = vector.load %arg4[%c0_6, %c0_7] : memref<128x128xf32, #tpu.memory_space<vmem>>, vector<128x128xf32>
    %cst_8 = arith.constant dense<0.000000e+00> : vector<16x128xf32>
    %9 = tpu.matmul %7, %8, %cst_8 {dimension_numbers = #tpu.dot_dimension_numbers<[1], [0], [0], [1], [0, 0, 1, 1], [], []>} : vector<16x128xf32>, vector<128x128xf32>, vector<16x128xf32> -> vector<16x128xf32>
    %c0_9 = arith.constant 0 : index
    %c0_10 = arith.constant 0 : index
    %10 = vector.load %arg5[%c0_9, %c0_10] : memref<1x128xf32, #tpu.memory_space<vmem>>, vector<1x128xf32>
    %11 = vector.broadcast %10 : vector<1x128xf32> to vector<16x128xf32>
    %12 = arith.addf %9, %11 : vector<16x128xf32>
    %c0_11 = arith.constant 0 : index
    %c0_12 = arith.constant 0 : index
    %13 = vector.load %arg6[%c0_11, %c0_12] : memref<16x128xf32, #tpu.memory_space<vmem>>, vector<16x128xf32>
    tpu.vector_store %arg6[%c0_11, %c0_12], %12 {strides = array<i32>} : memref<16x128xf32, #tpu.memory_space<vmem>>, vector<16x128xf32>,
    return
  }
  func.func @transform_0(%arg0: i32) -> (i32, i32) {
    %c0_i32 = arith.constant 0 : i32
    %c0_i32_0 = arith.constant 0 : i32
    return %arg0, %c0_i32 : i32, i32
  }
  func.func @transform_1(%arg0: i32) -> (i32, i32) {
    %c0_i32 = arith.constant 0 : i32
    %c0_i32_0 = arith.constant 0 : i32
    %c0_i32_1 = arith.constant 0 : i32
    return %c0_i32, %c0_i32_0 : i32, i32
  }
  func.func @transform_2(%arg0: i32) -> (i32, i32) {
    %c0_i32 = arith.constant 0 : i32
    %c0_i32_0 = arith.constant 0 : i32
    %c0_i32_1 = arith.constant 0 : i32
    return %c0_i32, %c0_i32_0 : i32, i32
  }
  func.func @transform_3(%arg0: i32) -> (i32, i32) {
    %c0_i32 = arith.constant 0 : i32
    %c0_i32_0 = arith.constant 0 : i32
    %c0_i32_1 = arith.constant 0 : i32
    return %c0_i32, %c0_i32_0 : i32, i32
  }
  func.func @transform_4(%arg0: i32) -> (i32, i32) {
    %c0_i32 = arith.constant 0 : i32
    %c0_i32_0 = arith.constant 0 : i32
    %c0_i32_1 = arith.constant 0 : i32
    return %c0_i32, %c0_i32_0 : i32, i32
  }
  func.func @transform_5(%arg0: i32) -> (i32, i32) {
    %c0_i32 = arith.constant 0 : i32
    %c0_i32_0 = arith.constant 0 : i32
    return %arg0, %c0_i32 : i32, i32
  }
}

</mosaic_0001>

<llo_original>
// kernel: tpu_custom_call.1
$region0: #{tpu_custom_call.1}
  #allocation0 [shape = 'u32[]', space=smem, size = 0x4, offset = 0x4, fixed_abs, tag = 'smem constant byte address 0x4 - core index']
  #allocation1 [shape = 'u32[144,128]{1,0:T(1,128)}', space=vmem, size = 0x12000, scoped, tag = 'internal scratch']
  %s0 = inlined_call_operand.hbm [shape: f32[8,128], index: 0, kind: input, shape index: {}]
  %s1 = inlined_call_operand.hbm [shape: f32[8,128], index: 1, kind: output, shape index: {}]
  %s2 = sld [smem:[#allocation0]]
  $region41: #{tpu_custom_call.1} parent=0
    _
  %s4 = ssub.s32 1, %s2
  %s5 = scalar_select 0, %s4, %s2
  $region1: #{tpu_custom_call.1} parent=0
    #allocation2 [shape = 'u8[4096]{0}', space=vmem, size = 0x1000, scoped, tag = 'input window, operand 0, single buffered']
    #allocation3 [shape = 's32[2]{0}', space=sflag, size = 0x8, scoped, tag = 'scoped memory for tpu_custom_call.1']
    #allocation4 [shape = 's32[2]{0}', space=sflag, size = 0x8, scoped, tag = 'scoped memory for tpu_custom_call.1']
    #allocation5 [shape = 'u8[4096]{0}', space=vmem, size = 0x1000, scoped, tag = 'output window, operand 0, single buffered']
    %6 = vsyncpa [#allocation3], 0
    %7 = vsyncpa [#allocation4], 0
    loop: start=0, step=1, limit=4
    $region2: #{tpu_custom_call.1} parent=1 // loop_pre_header
      _
    $region3: #{tpu_custom_call.1} parent=1 // loop_header
      %s9 = sphi 0, %s13
      %p10 = scmp.ge.s32.totalorder %s9, 4
      %s17 = sphi 0, %s17
      %s19 = sphi 0, %s17
      %s20 = sphi 0, %s19
      %s34 = sphi 0, %s20
      %s38 = sphi 0, %s38
      %s40 = sphi 0, %s38
      %s41 = sphi 0, %s40
      %s55 = sphi 0, %s41
    $region4: #{tpu_custom_call.1} parent=1 // loop_header_branch
      %12 = sbr.rel (%p10) target = $region8
    $region5: #{tpu_custom_call.1} parent=1 // loop_body
      %s14 = ssub.s32 %s9, 1
      %s15 = ssub.s32 %s9, 2
      %s16 = sadd.s32 %s9, 1
      %s18 = sadd.s32 %s17, 1
      %p21 = scmp.eq.s32.totalorder %s9, 1
      %p22 = scmp.ne.s32.totalorder %s17, %s19
      %p23 = scmp.eq.s32.totalorder %s9, 0
      %p24 = por %p22, %p23
      %p25 = scmp.ne.s32.totalorder %s17, %s19
      %p26 = scmp.eq.s32.totalorder %s14, 1
      %p27 = por %p25, %p26
      %p28 = scmp.ne.s32.totalorder %s19, %s20
      %p29 = scmp.eq.s32.totalorder %s14, 0
      %p30 = por %p28, %p29
      %p31 = scmp.ne.s32.totalorder %s19, %s20
      %p32 = scmp.eq.s32.totalorder %s15, 1
      %p33 = por %p31, %p32
      %p35 = scmp.ne.s32.totalorder %s20, %s34
      %p36 = scmp.eq.s32.totalorder %s15, 0
      %p37 = por %p35, %p36
      %s39 = sadd.s32 %s38, 1
      %p42 = scmp.eq.s32.totalorder %s9, 1
      %p43 = scmp.ne.s32.totalorder %s38, %s40
      %p44 = scmp.eq.s32.totalorder %s9, 0
      %p45 = por %p43, %p44
      %p46 = scmp.ne.s32.totalorder %s38, %s40
      %p47 = scmp.eq.s32.totalorder %s14, 1
      %p48 = por %p46, %p47
      %p49 = scmp.ne.s32.totalorder %s40, %s41
      %p50 = scmp.eq.s32.totalorder %s14, 0
      %p51 = por %p49, %p50
      %p52 = scmp.ne.s32.totalorder %s40, %s41
      %p53 = scmp.eq.s32.totalorder %s15, 1
      %p54 = por %p52, %p53
      %p56 = scmp.ne.s32.totalorder %s41, %s55
      %p57 = scmp.eq.s32.totalorder %s15, 0
      %p58 = por %p56, %p57
      %p59 = scmp.le.s32.totalorder 1, %s9
      %p60 = scmp.lt.s32.totalorder %s9, 3
      %p61 = pnand %p59, %p60
      %p62 = pneg %p61
      // Predicated region
      $region9: #{tpu_custom_call.1} parent=5 // pred_check
        _
      $region10: #{tpu_custom_call.1} parent=5 // pred_check_branch
        %64 = sbr.rel (%p61) target = $region12
      $region11: #{tpu_custom_call.1} parent=5 // pred_region
        %s65 = ssub.s32 %s9, 1
        // Predicated region
        $region13: #{tpu_custom_call.1} parent=11 // pred_check
          %p66 = pneg %p30
        $region14: #{tpu_custom_call.1} parent=11 // pred_check_branch
          %68 = sbr.rel (%p66) target = $region16
        $region15: #{tpu_custom_call.1} parent=11 // pred_region
          %s70 = ssub.s32 128, 128
          %71 = vsyncadd [#allocation3], %s70
          %s73 = sshll.u32 [#allocation2], 4
          %s74 = int_to_ptr.vmem [resolvable:$true] %s73
          %76 = dma.hbm_to_vmem [thread:$0]  %s0, 128, %s74, [#allocation3]
        $region16: #{tpu_custom_call.1} parent=11 // pred_fallthru
          _
      $region12: #{tpu_custom_call.1} parent=5 // pred_fallthru
        _
      %p77 = scmp.lt.s32.totalorder %s9, 2
      // Predicated region
      $region17: #{tpu_custom_call.1} parent=5 // pred_check
        %p78 = pneg %p77
      $region18: #{tpu_custom_call.1} parent=5 // pred_check_branch
        %80 = sbr.rel (%p78) target = $region20
      $region19: #{tpu_custom_call.1} parent=5 // pred_region
        _
      $region20: #{tpu_custom_call.1} parent=5 // pred_fallthru
        _
      %p81 = scmp.le.s32.totalorder 1, %s9
      %p82 = scmp.lt.s32.totalorder %s9, 3
      %p83 = pnand %p81, %p82
      %p84 = pneg %p83
      // Predicated region
      $region21: #{tpu_custom_call.1} parent=5 // pred_check
        _
      $region22: #{tpu_custom_call.1} parent=5 // pred_check_branch
        %86 = sbr.rel (%p83) target = $region24
      $region23: #{tpu_custom_call.1} parent=5 // pred_region
        %s87 = ssub.s32 %s9, 1
        // Predicated region
        $region25: #{tpu_custom_call.1} parent=23 // pred_check
          %p88 = pneg %p30
        $region26: #{tpu_custom_call.1} parent=23 // pred_check_branch
          %90 = sbr.rel (%p88) target = $region28
        $region27: #{tpu_custom_call.1} parent=23 // pred_region
          %91 = dma.done [#allocation3], 128
        $region28: #{tpu_custom_call.1} parent=23 // pred_fallthru
          _
        %p92 = pneg %p30
        %p93 = pneg %p27
        %p94 = pneg %p51
        %p95 = pneg %p48
        %v96 = vld [vmem:[#allocation2] sm:$0xff]
        %v97 = vadd.f32 %v96, 1.0
        %98 = vst [vmem:[#allocation5] sm:$0xff] %v97
        // Predicated region
        $region29: #{tpu_custom_call.1} parent=23 // pred_check
          %p99 = pneg %p48
        $region30: #{tpu_custom_call.1} parent=23 // pred_check_branch
          %101 = sbr.rel (%p99) target = $region32
        $region31: #{tpu_custom_call.1} parent=23 // pred_region
          %s103 = ssub.s32 128, 128
          %104 = vsyncadd [#allocation4], %s103
          %s106 = sshll.u32 [#allocation5], 4
          %s107 = int_to_ptr.vmem [resolvable:$true] %s106
          %109 = dma.vmem_to_hbm [thread:$0]  %s107, 128, %s1, [#allocation4]
        $region32: #{tpu_custom_call.1} parent=23 // pred_fallthru
          _
        // Predicated region
        $region33: #{tpu_custom_call.1} parent=23 // pred_check
          %p110 = pneg %p48
        $region34: #{tpu_custom_call.1} parent=23 // pred_check_branch
          %112 = sbr.rel (%p110) target = $region36
        $region35: #{tpu_custom_call.1} parent=23 // pred_region
          %113 = dma.done [#allocation4], 128
        $region36: #{tpu_custom_call.1} parent=23 // pred_fallthru
          _
      $region24: #{tpu_custom_call.1} parent=5 // pred_fallthru
        _
      %p114 = scmp.le.s32.totalorder 2, %s9
      // Predicated region
      $region37: #{tpu_custom_call.1} parent=5 // pred_check
        %p115 = pneg %p114
      $region38: #{tpu_custom_call.1} parent=5 // pred_check_branch
        %117 = sbr.rel (%p115) target = $region40
      $region39: #{tpu_custom_call.1} parent=5 // pred_region
        %s118 = ssub.s32 %s9, 2
      $region40: #{tpu_custom_call.1} parent=5 // pred_fallthru
        _
    $region6: #{tpu_custom_call.1} parent=1 // loop_footer
      %s13 = sadd.s32 1, %s9
    $region7: #{tpu_custom_call.1} parent=1 // loop_footer_branch
      %8 = sbr.rel target = $region3
    $region8: #{tpu_custom_call.1} parent=1 // loop_exit
      _
    %119 = vsyncpa [#allocation3], 1
    %s120 = scalar_lea.sflag [#allocation3], 1
    %121 = vsyncpa %s120, 1
    %122 = vsyncpa [#allocation4], 1
    %s123 = scalar_lea.sflag [#allocation4], 1
    %124 = vsyncpa %s123, 1

// kernel: _ffn_impl.1
$region0: #{_ffn_impl.1}
  #allocation0 [shape = 'u32[]', space=smem, size = 0x4, offset = 0x4, fixed_abs, tag = 'smem constant byte address 0x4 - core index']
  #allocation1 [shape = 'u32[144,128]{1,0:T(1,128)}', space=vmem, size = 0x12000, scoped, tag = 'internal scratch']
  %s0 = inlined_call_operand.vmem [shape: f32[16,128], index: 0, kind: input, shape index: {}]
  %s1 = inlined_call_operand.vmem [shape: f32[128,128], index: 1, kind: input, shape index: {}]
  %s2 = inlined_call_operand.vmem [shape: f32[1,128], index: 2, kind: input, shape index: {}]
  %s3 = inlined_call_operand.vmem [shape: f32[128,128], index: 3, kind: input, shape index: {}]
  %s4 = inlined_call_operand.vmem [shape: f32[1,128], index: 4, kind: input, shape index: {}]
  %s5 = inlined_call_operand.vmem [shape: f32[16,128], index: 5, kind: output, shape index: {}]
  %s6 = sld [smem:[#allocation0]]
  $region30: #{_ffn_impl.1} parent=0
    _
  %s8 = ssub.s32 1, %s6
  %s9 = scalar_select 0, %s8, %s6
  // Predicated region
  $region2: #{_ffn_impl.1} parent=0 // pred_check
    _
  $region3: #{_ffn_impl.1} parent=0 // pred_check_branch
    %11 = sbr.rel (0) target = $region5
  $region4: #{_ffn_impl.1} parent=0 // pred_region
    _
  $region5: #{_ffn_impl.1} parent=0 // pred_fallthru
    _
  // Predicated region
  $region6: #{_ffn_impl.1} parent=0 // pred_check
    _
  $region7: #{_ffn_impl.1} parent=0 // pred_check_branch
    %13 = sbr.rel (0) target = $region9
  $region8: #{_ffn_impl.1} parent=0 // pred_region
    _
  $region9: #{_ffn_impl.1} parent=0 // pred_fallthru
    _
  // Predicated region
  $region10: #{_ffn_impl.1} parent=0 // pred_check
    _
  $region11: #{_ffn_impl.1} parent=0 // pred_check_branch
    %15 = sbr.rel (0) target = $region13
  $region12: #{_ffn_impl.1} parent=0 // pred_region
    _
  $region13: #{_ffn_impl.1} parent=0 // pred_fallthru
    _
  // Predicated region
  $region14: #{_ffn_impl.1} parent=0 // pred_check
    _
  $region15: #{_ffn_impl.1} parent=0 // pred_check_branch
    %17 = sbr.rel (0) target = $region17
  $region16: #{_ffn_impl.1} parent=0 // pred_region
    _
  $region17: #{_ffn_impl.1} parent=0 // pred_fallthru
    _
  // Predicated region
  $region18: #{_ffn_impl.1} parent=0 // pred_check
    _
  $region19: #{_ffn_impl.1} parent=0 // pred_check_branch
    %19 = sbr.rel (0) target = $region21
  $region20: #{_ffn_impl.1} parent=0 // pred_region
    _
  $region21: #{_ffn_impl.1} parent=0 // pred_fallthru
    _
  %v20 = vld [vmem:[%s0] sm:$0xff]
  %v21 = vld [vmem:[%s0 + $0x8] sm:$0xff]
  %v22 = vld [vmem:[%s1] sm:$0xff]
  %v23 = vld [vmem:[%s1 + $0x8] sm:$0xff]
  %v24 = vld [vmem:[%s1 + $0x10] sm:$0xff]
  %v25 = vld [vmem:[%s1 + $0x18] sm:$0xff]
  %v26 = vld [vmem:[%s1 + $0x20] sm:$0xff]
  %v27 = vld [vmem:[%s1 + $0x28] sm:$0xff]
  %v28 = vld [vmem:[%s1 + $0x30] sm:$0xff]
  %v29 = vld [vmem:[%s1 + $0x38] sm:$0xff]
  %v30 = vld [vmem:[%s1 + $0x40] sm:$0xff]
  %v31 = vld [vmem:[%s1 + $0x48] sm:$0xff]
  %v32 = vld [vmem:[%s1 + $0x50] sm:$0xff]
  %v33 = vld [vmem:[%s1 + $0x58] sm:$0xff]
  %v34 = vld [vmem:[%s1 + $0x60] sm:$0xff]
  %v35 = vld [vmem:[%s1 + $0x68] sm:$0xff]
  %v36 = vld [vmem:[%s1 + $0x70] sm:$0xff]
  %v37 = vld [vmem:[%s1 + $0x78] sm:$0xff]
  %v38 = vld [vmem:[%s2] sm:$0x1]
  %v40 = vlaneseq
  %v41 = vshrl.u32 %v40, 7
  %v42 = vsub.s32 0, %v41
  %v43 = vrot.slane %v38, %v42
  %45 = vmatprep.subr.mxu0 0.0
  %46 = vmatpush1.msra.mxu0 %v22
  %47 = vmatprep.subr.mxu0 0.0
  %48 = vmatpush1.msra.mxu0 %v23
  %49 = vmatprep.subr.mxu0 0.0
  %50 = vmatpush1.msra.mxu0 %v24
  %51 = vmatprep.subr.mxu0 0.0
  %52 = vmatpush1.msra.mxu0 %v25
  %53 = vmatprep.subr.mxu0 0.0
  %54 = vmatpush1.msra.mxu0 %v26
  %55 = vmatprep.subr.mxu0 0.0
  %56 = vmatpush1.msra.mxu0 %v27
  %57 = vmatprep.subr.mxu0 0.0
  %58 = vmatpush1.msra.mxu0 %v28
  %59 = vmatprep.subr.mxu0 0.0
  %60 = vmatpush1.msra.mxu0 %v29
  %61 = vmatprep.subr.mxu0 0.0
  %62 = vmatpush1.msra.mxu0 %v30
  %63 = vmatprep.subr.mxu0 0.0
  %64 = vmatpush1.msra.mxu0 %v31
  %65 = vmatprep.subr.mxu0 0.0
  %66 = vmatpush1.msra.mxu0 %v32
  %67 = vmatprep.subr.mxu0 0.0
  %68 = vmatpush1.msra.mxu0 %v33
  %69 = vmatprep.subr.mxu0 0.0
  %70 = vmatpush1.msra.mxu0 %v34
  %71 = vmatprep.subr.mxu0 0.0
  %72 = vmatpush1.msra.mxu0 %v35
  %73 = vmatprep.subr.mxu0 0.0
  %74 = vmatpush1.msra.mxu0 %v36
  %75 = vmatprep.subr.mxu0 0.0
  %76 = vmatpush1.msra.mxu0 %v37
  %77 = vmatprep.subr.mxu0 0.0
  %78 = vmatpush1.msra.mxu0 0.0
  %79 = vmatprep.subr.mxu0 0.0
  %80 = vmatpush1.msra.mxu0 0.0
  %81 = vmatprep.subr.mxu0 0.0
  %82 = vmatpush1.msra.mxu0 0.0
  %83 = vmatprep.subr.mxu0 0.0
  %84 = vmatpush1.msra.mxu0 0.0
  %85 = vmatprep.subr.mxu0 0.0
  %86 = vmatpush1.msra.mxu0 0.0
  %87 = vmatprep.subr.mxu0 0.0
  %88 = vmatpush1.msra.mxu0 0.0
  %89 = vmatprep.subr.mxu0 0.0
  %90 = vmatpush1.msra.mxu0 0.0
  %91 = vmatprep.subr.mxu0 0.0
  %92 = vmatpush1.msra.mxu0 0.0
  %93 = vmatprep.subr.mxu0 0.0
  %94 = vmatpush1.msra.mxu0 0.0
  %95 = vmatprep.subr.mxu0 0.0
  %96 = vmatpush1.msra.mxu0 0.0
  %97 = vmatprep.subr.mxu0 0.0
  %98 = vmatpush1.msra.mxu0 0.0
  %99 = vmatprep.subr.mxu0 0.0
  %100 = vmatpush1.msra.mxu0 0.0
  %101 = vmatprep.subr.mxu0 0.0
  %102 = vmatpush1.msra.mxu0 0.0
  %103 = vmatprep.subr.mxu0 0.0
  %104 = vmatpush1.msra.mxu0 0.0
  %105 = vmatprep.subr.mxu0 0.0
  %106 = vmatpush1.msra.mxu0 0.0
  %107 = vmatprep.subr.mxu0 0.0
  %108 = vmatpush1.msra.mxu0 0.0
  %109 = vmatprep.mubr.f32.mxu0 0.0
  %110 = vmatmul.mubr.f32.gmra.mrb[0].mxu0 %v20
  %v111 = vpop.f32.mrb[0].mxu0
  %v112 = vadd.f32 %v43, %v111
  %v113 = vpop.f32.mrb[0].mxu0
  %114 = vmatprep.mubr.f32.mxu0 0.0
  %115 = vmatmul.mubr.f32.gmra.mrb[0].mxu0 %v21
  %v116 = vpop.f32.mrb[0].mxu0
  %v117 = vadd.f32 %v43, %v116
  %v118 = vpop.f32.mrb[0].mxu0
  %119 = vdwg.mxu0
  %v120 = vmax.f32 %v112, 0.0
  %v121 = vmax.f32 %v117, 0.0
  %v122 = vld [vmem:[%s3] sm:$0xff]
  %v123 = vld [vmem:[%s3 + $0x8] sm:$0xff]
  %v124 = vld [vmem:[%s3 + $0x10] sm:$0xff]
  %v125 = vld [vmem:[%s3 + $0x18] sm:$0xff]
  %v126 = vld [vmem:[%s3 + $0x20] sm:$0xff]
  %v127 = vld [vmem:[%s3 + $0x28] sm:$0xff]
  %v128 = vld [vmem:[%s3 + $0x30] sm:$0xff]
  %v129 = vld [vmem:[%s3 + $0x38] sm:$0xff]
  %v130 = vld [vmem:[%s3 + $0x40] sm:$0xff]
  %v131 = vld [vmem:[%s3 + $0x48] sm:$0xff]
  %v132 = vld [vmem:[%s3 + $0x50] sm:$0xff]
  %v133 = vld [vmem:[%s3 + $0x58] sm:$0xff]
  %v134 = vld [vmem:[%s3 + $0x60] sm:$0xff]
  %v135 = vld [vmem:[%s3 + $0x68] sm:$0xff]
  %v136 = vld [vmem:[%s3 + $0x70] sm:$0xff]
  %v137 = vld [vmem:[%s3 + $0x78] sm:$0xff]
  %v138 = vld [vmem:[%s4] sm:$0x1]
  %v140 = vlaneseq
  %v141 = vshrl.u32 %v140, 7
  %v142 = vsub.s32 0, %v141
  %v143 = vrot.slane %v138, %v142
  %145 = vmatprep.subr.mxu0 0.0
  %146 = vmatpush1.msra.mxu0 %v122
  %147 = vmatprep.subr.mxu0 0.0
  %148 = vmatpush1.msra.mxu0 %v123
  %149 = vmatprep.subr.mxu0 0.0
  %150 = vmatpush1.msra.mxu0 %v124
  %151 = vmatprep.subr.mxu0 0.0
  %152 = vmatpush1.msra.mxu0 %v125
  %153 = vmatprep.subr.mxu0 0.0
  %154 = vmatpush1.msra.mxu0 %v126
  %155 = vmatprep.subr.mxu0 0.0
  %156 = vmatpush1.msra.mxu0 %v127
  %157 = vmatprep.subr.mxu0 0.0
  %158 = vmatpush1.msra.mxu0 %v128
  %159 = vmatprep.subr.mxu0 0.0
  %160 = vmatpush1.msra.mxu0 %v129
  %161 = vmatprep.subr.mxu0 0.0
  %162 = vmatpush1.msra.mxu0 %v130
  %163 = vmatprep.subr.mxu0 0.0
  %164 = vmatpush1.msra.mxu0 %v131
  %165 = vmatprep.subr.mxu0 0.0
  %166 = vmatpush1.msra.mxu0 %v132
  %167 = vmatprep.subr.mxu0 0.0
  %168 = vmatpush1.msra.mxu0 %v133
  %169 = vmatprep.subr.mxu0 0.0
  %170 = vmatpush1.msra.mxu0 %v134
  %171 = vmatprep.subr.mxu0 0.0
  %172 = vmatpush1.msra.mxu0 %v135
  %173 = vmatprep.subr.mxu0 0.0
  %174 = vmatpush1.msra.mxu0 %v136
  %175 = vmatprep.subr.mxu0 0.0
  %176 = vmatpush1.msra.mxu0 %v137
  %177 = vmatprep.subr.mxu0 0.0
  %178 = vmatpush1.msra.mxu0 0.0
  %179 = vmatprep.subr.mxu0 0.0
  %180 = vmatpush1.msra.mxu0 0.0
  %181 = vmatprep.subr.mxu0 0.0
  %182 = vmatpush1.msra.mxu0 0.0
  %183 = vmatprep.subr.mxu0 0.0
  %184 = vmatpush1.msra.mxu0 0.0
  %185 = vmatprep.subr.mxu0 0.0
  %186 = vmatpush1.msra.mxu0 0.0
  %187 = vmatprep.subr.mxu0 0.0
  %188 = vmatpush1.msra.mxu0 0.0
  %189 = vmatprep.subr.mxu0 0.0
  %190 = vmatpush1.msra.mxu0 0.0
  %191 = vmatprep.subr.mxu0 0.0
  %192 = vmatpush1.msra.mxu0 0.0
  %193 = vmatprep.subr.mxu0 0.0
  %194 = vmatpush1.msra.mxu0 0.0
  %195 = vmatprep.subr.mxu0 0.0
  %196 = vmatpush1.msra.mxu0 0.0
  %197 = vmatprep.subr.mxu0 0.0
  %198 = vmatpush1.msra.mxu0 0.0
  %199 = vmatprep.subr.mxu0 0.0
  %200 = vmatpush1.msra.mxu0 0.0
  %201 = vmatprep.subr.mxu0 0.0
  %202 = vmatpush1.msra.mxu0 0.0
  %203 = vmatprep.subr.mxu0 0.0
  %204 = vmatpush1.msra.mxu0 0.0
  %205 = vmatprep.subr.mxu0 0.0
  %206 = vmatpush1.msra.mxu0 0.0
  %207 = vmatprep.subr.mxu0 0.0
  %208 = vmatpush1.msra.mxu0 0.0
  %209 = vmatprep.mubr.f32.mxu0 0.0
  %210 = vmatmul.mubr.f32.gmra.mrb[0].mxu0 %v120
  %v211 = vpop.f32.mrb[0].mxu0
  %v212 = vadd.f32 %v143, %v211
  %v213 = vpop.f32.mrb[0].mxu0
  %214 = vmatprep.mubr.f32.mxu0 0.0
  %215 = vmatmul.mubr.f32.gmra.mrb[0].mxu0 %v121
  %v216 = vpop.f32.mrb[0].mxu0
  %v217 = vadd.f32 %v143, %v216
  %v218 = vpop.f32.mrb[0].mxu0
  %219 = vdwg.mxu0
  %220 = vst [vmem:[%s5] sm:$0xff] %v212
  %221 = vst [vmem:[%s5 + $0x8] sm:$0xff] %v217
  // Predicated region
  $region22: #{_ffn_impl.1} parent=0 // pred_check
    _
  $region23: #{_ffn_impl.1} parent=0 // pred_check_branch
    %223 = sbr.rel (0) target = $region25
  $region24: #{_ffn_impl.1} parent=0 // pred_region
    _
  $region25: #{_ffn_impl.1} parent=0 // pred_fallthru
    _
  // Predicated region
  $region26: #{_ffn_impl.1} parent=0 // pred_check
    _
  $region27: #{_ffn_impl.1} parent=0 // pred_check_branch
    %225 = sbr.rel (0) target = $region29
  $region28: #{_ffn_impl.1} parent=0 // pred_region
    _
  $region29: #{_ffn_impl.1} parent=0 // pred_fallthru
    _

</llo_original>
